<compile_context>
chip_gen: v6e
topology: v6e:2x2x1
jax: 0.10.0
libtpu: 0.0.40
codegen_flags: <defaults>
</compile_context>

<pallas_src>
import jax
import jax.numpy as jnp
from jax.experimental import pallas as pl
from jax.experimental.pallas import tpu as pltpu


def mlp_kernel(x_ref, w1_ref, b1_ref, w2_ref, b2_ref,
               w3_ref, b3_ref, w4_ref, b4_ref, out_ref):
    # x_ref: (F, TB) bf16 (batch on lanes); w_i: (out, in) bf16; b_i: (out, 1) f32
    # out_ref: (1, TB) f32.
    h = x_ref[...]                                                    # bf16 (F, TB)

    # Layer 1: (128, F) @ (F, TB) -> (128, TB), f32 accumulation on the MXU.
    z = jnp.dot(w1_ref[...], h, preferred_element_type=jnp.float32) + b1_ref[...]
    h = jnp.maximum(z, 0.0).astype(jnp.bfloat16)

    # Layer 2: (64, 128) @ (128, TB) -> (64, TB)
    z = jnp.dot(w2_ref[...], h, preferred_element_type=jnp.float32) + b2_ref[...]
    h = jnp.maximum(z, 0.0).astype(jnp.bfloat16)

    # Layer 3: (32, 64) @ (64, TB) -> (32, TB)
    z = jnp.dot(w3_ref[...], h, preferred_element_type=jnp.float32) + b3_ref[...]
    h = jnp.maximum(z, 0.0).astype(jnp.bfloat16)

    # Layer 4 (padded to 8 output rows): (8, 32) @ (32, TB) -> (8, TB).
    z = jnp.dot(w4_ref[...], h, preferred_element_type=jnp.float32) + b4_ref[...]
    # Keep only the real output row (row 0) -> lane-dense (1, TB) store.
    out_ref[...] = jax.nn.sigmoid(z[0:1, :]).astype(out_ref.dtype)


def _pick_tile_b(batch):
    # Largest lane-dense tile (multiple of 128, <= 2048) that gives >= 2 grid
    # steps (pipelining + v7x dual-TC sharding); fall back to whole batch.
    for cand in (2048, 1024, 512, 256, 128):
        if batch % cand == 0 and batch // cand >= 2:
            return cand
    return batch


def mlp_forward(x, params, *, tile_b=None):
    """x: (B, F) float array. params: w1..w4 in PyTorch (out, in) layout,
    b1..b4 of shape (out, 1). Returns sigmoid probabilities of shape (B, 1)."""
    B, F = x.shape
    if tile_b is None:
        tile_b = _pick_tile_b(B)
    assert B % tile_b == 0, "batch must be divisible by tile_b"
    if tile_b != B:
        assert tile_b % 128 == 0, (
            "tile_b must be a multiple of 128 (lane width) when tiling the batch")

    # Wrapper-side layout plumbing: batch onto lanes, bf16 operands for the MXU.
    x_t = x.T.astype(jnp.bfloat16)                                    # (F, B)
    w1 = params["w1"].astype(jnp.bfloat16)                            # (128, F)
    w2 = params["w2"].astype(jnp.bfloat16)                            # (64, 128)
    w3 = params["w3"].astype(jnp.bfloat16)                            # (32, 64)
    b1 = params["b1"].astype(jnp.float32)                             # (128, 1)
    b2 = params["b2"].astype(jnp.float32)                             # (64, 1)
    b3 = params["b3"].astype(jnp.float32)                             # (32, 1)
    # Pad the 1-wide final layer up to the 8-row sublane granule (zeros).
    w4 = jnp.zeros((8, params["w4"].shape[1]), jnp.bfloat16)
    w4 = w4.at[0:1].set(params["w4"].astype(jnp.bfloat16))            # (8, 32)
    b4 = jnp.zeros((8, 1), jnp.float32).at[0:1].set(
        params["b4"].astype(jnp.float32))                             # (8, 1)

    grid = (B // tile_b,)

    def replicated(shape):
        return pl.BlockSpec(shape, lambda i: (0,) * len(shape))

    out_t = pl.pallas_call(
        mlp_kernel,
        out_shape=jax.ShapeDtypeStruct((1, B), jnp.float32),
        grid_spec=pltpu.PrefetchScalarGridSpec(
            num_scalar_prefetch=0,
            grid=grid,
            in_specs=[
                pl.BlockSpec((F, tile_b), lambda i: (0, i)),          # x^T batch tile
                replicated(w1.shape), replicated(b1.shape),
                replicated(w2.shape), replicated(b2.shape),
                replicated(w3.shape), replicated(b3.shape),
                replicated(w4.shape), replicated(b4.shape),
            ],
            out_specs=pl.BlockSpec((1, tile_b), lambda i: (0, i)),
        ),
        compiler_params=pltpu.CompilerParams(
            # Batch axis is embarrassingly parallel -> shards across both v7x
            # TensorCores; single-TC v5e/v6e simply pipeline over it.
            dimension_semantics=("parallel",),
        ),
    )(x_t, w1, b1, w2, b2, w3, b3, w4, b4)

    return out_t.reshape(B, 1)


def init_params(key, number_of_features):
    """nn.Linear-style init; weights kept in PyTorch (out, in) layout,
    biases stored as (out, 1) so they broadcast along the lane (batch) dim."""
    dims = [number_of_features, 128, 64, 32, 1]
    params = {}
    for idx in range(4):
        fan_in, fan_out = dims[idx], dims[idx + 1]
        key, kw, kb = jax.random.split(key, 3)
        bound = 1.0 / jnp.sqrt(fan_in)
        params[f"w{idx + 1}"] = jax.random.uniform(
            kw, (fan_out, fan_in), jnp.float32, -bound, bound)
        params[f"b{idx + 1}"] = jax.random.uniform(
            kb, (fan_out, 1), jnp.float32, -bound, bound)
    return params


def mlp_reference_f32(x, params):
    """Full-f32 reference matching PyTorch semantics (y = x @ W.T + b)."""
    h = x
    for i in range(1, 4):
        h = jnp.maximum(h @ params[f"w{i}"].T + params[f"b{i}"].T, 0.0)
    return jax.nn.sigmoid(h @ params["w4"].T + params["b4"].T)


def mlp_reference_bf16(x, params):
    """Reference with the same bf16-operand / f32-accumulation recipe as the kernel."""
    h = x.T.astype(jnp.bfloat16)
    z = None
    for i in range(1, 5):
        w = params[f"w{i}"].astype(jnp.bfloat16)
        z = jnp.dot(w, h, preferred_element_type=jnp.float32) + params[f"b{i}"]
        if i < 4:
            h = jnp.maximum(z, 0.0).astype(jnp.bfloat16)
    return jax.nn.sigmoid(z).reshape(-1, 1)


if __name__ == "__main__":
    # TODO(synk): training utilities (BCELoss, Adam, fit/save/predict wrappers)
    # have no Pallas equivalent here; only the forward pass is implemented.
    key = jax.random.PRNGKey(0)
    number_of_features = 32
    batch = 8

    key, kx = jax.random.split(key)
    x = jax.random.normal(kx, (batch, number_of_features), jnp.float32)
    params = init_params(key, number_of_features)

    out = jax.block_until_ready(mlp_forward(x, params))
    assert out.shape == (batch, 1)
    assert jnp.allclose(out, mlp_reference_bf16(x, params), atol=1e-3), "bf16-matched mismatch"
    assert jnp.allclose(out, mlp_reference_f32(x, params), atol=2e-2), "f32 reference mismatch"

    # Exercise the tiled / pipelined path: grid=(2,), lane-dense 128-wide batch tiles.
    key, kx2 = jax.random.split(key)
    x_big = jax.random.normal(kx2, (256, number_of_features), jnp.float32)
    out_big = jax.block_until_ready(mlp_forward(x_big, params))
    assert out_big.shape == (256, 1)
    assert jnp.allclose(out_big, mlp_reference_bf16(x_big, params), atol=1e-3)
    assert jnp.allclose(out_big, mlp_reference_f32(x_big, params), atol=2e-2)

    print("KERNEL_OK")
</pallas_src>

<mosaic_0001>
module attributes {stable_mosaic.version = 11 : i64} {
  func.func @mlp_kernel(%arg0: i32, %arg1: memref<32x8xbf16, #tpu.memory_space<vmem>>, %arg2: memref<128x32xbf16, #tpu.memory_space<vmem>>, %arg3: memref<128x1xf32, #tpu.memory_space<vmem>>, %arg4: memref<64x128xbf16, #tpu.memory_space<vmem>>, %arg5: memref<64x1xf32, #tpu.memory_space<vmem>>, %arg6: memref<32x64xbf16, #tpu.memory_space<vmem>>, %arg7: memref<32x1xf32, #tpu.memory_space<vmem>>, %arg8: memref<8x32xbf16, #tpu.memory_space<vmem>>, %arg9: memref<8x1xf32, #tpu.memory_space<vmem>>, %arg10: memref<1x8xf32, #tpu.memory_space<vmem>>) attributes {dimension_semantics = [#tpu.dimension_semantics<parallel>], iteration_bounds = array<i64: 1>, scalar_prefetch = 0 : i64, scratch_operands = 0 : i64, tpu.core_type = #tpu.core_type<tc>, window_params = [{transform_indices = @transform_0, window_bounds = array<i64: 32, 8>}, {pipeline_mode = #tpu.pipeline_mode<synchronous>, transform_indices = @transform_1, window_bounds = array<i64: 128, 32>}, {pipeline_mode = #tpu.pipeline_mode<synchronous>, transform_indices = @transform_2, window_bounds = array<i64: 128, 1>}, {pipeline_mode = #tpu.pipeline_mode<synchronous>, transform_indices = @transform_3, window_bounds = array<i64: 64, 128>}, {pipeline_mode = #tpu.pipeline_mode<synchronous>, transform_indices = @transform_4, window_bounds = array<i64: 64, 1>}, {pipeline_mode = #tpu.pipeline_mode<synchronous>, transform_indices = @transform_5, window_bounds = array<i64: 32, 64>}, {pipeline_mode = #tpu.pipeline_mode<synchronous>, transform_indices = @transform_6, window_bounds = array<i64: 32, 1>}, {pipeline_mode = #tpu.pipeline_mode<synchronous>, transform_indices = @transform_7, window_bounds = array<i64: 8, 32>}, {pipeline_mode = #tpu.pipeline_mode<synchronous>, transform_indices = @transform_8, window_bounds = array<i64: 8, 1>}, {transform_indices = @transform_9, window_bounds = array<i64: 1, 8>}]} {
    %c0 = arith.constant 0 : index
    %c0_0 = arith.constant 0 : index
    %0 = vector.load %arg1[%c0, %c0_0] : memref<32x8xbf16, #tpu.memory_space<vmem>>, vector<32x8xbf16>
    %c0_1 = arith.constant 0 : index
    %c0_2 = arith.constant 0 : index
    %1 = vector.load %arg2[%c0_1, %c0_2] : memref<128x32xbf16, #tpu.memory_space<vmem>>, vector<128x32xbf16>
    %cst = arith.constant dense<0.000000e+00> : vector<128x8xf32>
    %2 = tpu.matmul %1, %0, %cst {dimension_numbers = #tpu.dot_dimension_numbers<[1], [0], [0], [1], [0, 0, 1, 1], [], []>} : vector<128x32xbf16>, vector<32x8xbf16>, vector<128x8xf32> -> vector<128x8xf32>
    %c0_3 = arith.constant 0 : index
    %c0_4 = arith.constant 0 : index
    %3 = vector.load %arg3[%c0_3, %c0_4] : memref<128x1xf32, #tpu.memory_space<vmem>>, vector<128x1xf32>
    %4 = vector.broadcast %3 : vector<128x1xf32> to vector<128x8xf32>
    %5 = arith.addf %2, %4 : vector<128x8xf32>
    %cst_5 = arith.constant 0.000000e+00 : f32
    %6 = vector.broadcast %cst_5 : f32 to vector<128x8xf32>
    %7 = arith.maximumf %5, %6 : vector<128x8xf32>
    %8 = arith.truncf %7 : vector<128x8xf32> to vector<128x8xbf16>
    %c0_6 = arith.constant 0 : index
    %c0_7 = arith.constant 0 : index
    %9 = vector.load %arg4[%c0_6, %c0_7] : memref<64x128xbf16, #tpu.memory_space<vmem>>, vector<64x128xbf16>
    %cst_8 = arith.constant dense<0.000000e+00> : vector<64x8xf32>
    %10 = tpu.matmul %9, %8, %cst_8 {dimension_numbers = #tpu.dot_dimension_numbers<[1], [0], [0], [1], [0, 0, 1, 1], [], []>} : vector<64x128xbf16>, vector<128x8xbf16>, vector<64x8xf32> -> vector<64x8xf32>
    %c0_9 = arith.constant 0 : index
    %c0_10 = arith.constant 0 : index
    %11 = vector.load %arg5[%c0_9, %c0_10] : memref<64x1xf32, #tpu.memory_space<vmem>>, vector<64x1xf32>
    %12 = vector.broadcast %11 : vector<64x1xf32> to vector<64x8xf32>
    %13 = arith.addf %10, %12 : vector<64x8xf32>
    %cst_11 = arith.constant 0.000000e+00 : f32
    %14 = vector.broadcast %cst_11 : f32 to vector<64x8xf32>
    %15 = arith.maximumf %13, %14 : vector<64x8xf32>
    %16 = arith.truncf %15 : vector<64x8xf32> to vector<64x8xbf16>
    %c0_12 = arith.constant 0 : index
    %c0_13 = arith.constant 0 : index
    %17 = vector.load %arg6[%c0_12, %c0_13] : memref<32x64xbf16, #tpu.memory_space<vmem>>, vector<32x64xbf16>
    %cst_14 = arith.constant dense<0.000000e+00> : vector<32x8xf32>
    %18 = tpu.matmul %17, %16, %cst_14 {dimension_numbers = #tpu.dot_dimension_numbers<[1], [0], [0], [1], [0, 0, 1, 1], [], []>} : vector<32x64xbf16>, vector<64x8xbf16>, vector<32x8xf32> -> vector<32x8xf32>
    %c0_15 = arith.constant 0 : index
    %c0_16 = arith.constant 0 : index
    %19 = vector.load %arg7[%c0_15, %c0_16] : memref<32x1xf32, #tpu.memory_space<vmem>>, vector<32x1xf32>
    %20 = vector.broadcast %19 : vector<32x1xf32> to vector<32x8xf32>
    %21 = arith.addf %18, %20 : vector<32x8xf32>
    %cst_17 = arith.constant 0.000000e+00 : f32
    %22 = vector.broadcast %cst_17 : f32 to vector<32x8xf32>
    %23 = arith.maximumf %21, %22 : vector<32x8xf32>
    %24 = arith.truncf %23 : vector<32x8xf32> to vector<32x8xbf16>
    %c0_18 = arith.constant 0 : index
    %c0_19 = arith.constant 0 : index
    %25 = vector.load %arg8[%c0_18, %c0_19] : memref<8x32xbf16, #tpu.memory_space<vmem>>, vector<8x32xbf16>
    %cst_20 = arith.constant dense<0.000000e+00> : vector<8x8xf32>
    %26 = tpu.matmul %25, %24, %cst_20 {dimension_numbers = #tpu.dot_dimension_numbers<[1], [0], [0], [1], [0, 0, 1, 1], [], []>} : vector<8x32xbf16>, vector<32x8xbf16>, vector<8x8xf32> -> vector<8x8xf32>
    %c0_21 = arith.constant 0 : index
    %c0_22 = arith.constant 0 : index
    %27 = vector.load %arg9[%c0_21, %c0_22] : memref<8x1xf32, #tpu.memory_space<vmem>>, vector<8x1xf32>
    %28 = vector.broadcast %27 : vector<8x1xf32> to vector<8x8xf32>
    %29 = arith.addf %26, %28 : vector<8x8xf32>
    %30 = vector.extract_strided_slice %29 {offsets = [0, 0], sizes = [1, 8], strides = [1, 1]} : vector<8x8xf32> to vector<1x8xf32>
    %31 = arith.negf %30 : vector<1x8xf32>
    %32 = math.exp %31 : vector<1x8xf32>
    %cst_23 = arith.constant 1.000000e+00 : f32
    %33 = vector.broadcast %cst_23 : f32 to vector<1x8xf32>
    %34 = arith.addf %33, %32 : vector<1x8xf32>
    %35 = arith.divf %33, %34 : vector<1x8xf32>
    %c0_24 = arith.constant 0 : index
    %c0_25 = arith.constant 0 : index
    %36 = vector.load %arg10[%c0_24, %c0_25] : memref<1x8xf32, #tpu.memory_space<vmem>>, vector<1x8xf32>
    tpu.vector_store %arg10[%c0_24, %c0_25], %35 {strides = array<i32>} : memref<1x8xf32, #tpu.memory_space<vmem>>, vector<1x8xf32>,
    return
  }
  func.func @transform_0(%arg0: i32) -> (i32, i32) {
    %c0_i32 = arith.constant 0 : i32
    %c0_i32_0 = arith.constant 0 : i32
    return %c0_i32, %arg0 : i32, i32
  }
  func.func @transform_1(%arg0: i32) -> (i32, i32) {
    %c0_i32 = arith.constant 0 : i32
    %c0_i32_0 = arith.constant 0 : i32
    %c0_i32_1 = arith.constant 0 : i32
    return %c0_i32, %c0_i32_0 : i32, i32
  }
  func.func @transform_2(%arg0: i32) -> (i32, i32) {
    %c0_i32 = arith.constant 0 : i32
    %c0_i32_0 = arith.constant 0 : i32
    %c0_i32_1 = arith.constant 0 : i32
    return %c0_i32, %c0_i32_0 : i32, i32
  }
  func.func @transform_3(%arg0: i32) -> (i32, i32) {
    %c0_i32 = arith.constant 0 : i32
    %c0_i32_0 = arith.constant 0 : i32
    %c0_i32_1 = arith.constant 0 : i32
    return %c0_i32, %c0_i32_0 : i32, i32
  }
  func.func @transform_4(%arg0: i32) -> (i32, i32) {
    %c0_i32 = arith.constant 0 : i32
    %c0_i32_0 = arith.constant 0 : i32
    %c0_i32_1 = arith.constant 0 : i32
    return %c0_i32, %c0_i32_0 : i32, i32
  }
  func.func @transform_5(%arg0: i32) -> (i32, i32) {
    %c0_i32 = arith.constant 0 : i32
    %c0_i32_0 = arith.constant 0 : i32
    %c0_i32_1 = arith.constant 0 : i32
    return %c0_i32, %c0_i32_0 : i32, i32
  }
  func.func @transform_6(%arg0: i32) -> (i32, i32) {
    %c0_i32 = arith.constant 0 : i32
    %c0_i32_0 = arith.constant 0 : i32
    %c0_i32_1 = arith.constant 0 : i32
    return %c0_i32, %c0_i32_0 : i32, i32
  }
  func.func @transform_7(%arg0: i32) -> (i32, i32) {
    %c0_i32 = arith.constant 0 : i32
    %c0_i32_0 = arith.constant 0 : i32
    %c0_i32_1 = arith.constant 0 : i32
    return %c0_i32, %c0_i32_0 : i32, i32
  }
  func.func @transform_8(%arg0: i32) -> (i32, i32) {
    %c0_i32 = arith.constant 0 : i32
    %c0_i32_0 = arith.constant 0 : i32
    %c0_i32_1 = arith.constant 0 : i32
    return %c0_i32, %c0_i32_0 : i32, i32
  }
  func.func @transform_9(%arg0: i32) -> (i32, i32) {
    %c0_i32 = arith.constant 0 : i32
    %c0_i32_0 = arith.constant 0 : i32
    return %c0_i32, %arg0 : i32, i32
  }
}

</mosaic_0001>

<llo_original>
// kernel: tpu_custom_call.1
$region0: #{tpu_custom_call.1}
  #allocation0 [shape = 'u32[]', space=smem, size = 0x4, offset = 0x4, fixed_abs, tag = 'smem constant byte address 0x4 - core index']
  #allocation1 [shape = 'u32[144,128]{1,0:T(1,128)}', space=vmem, size = 0x12000, scoped, tag = 'internal scratch']
  %s0 = inlined_call_operand.vmem [shape: bf16[32,8], index: 0, kind: input, shape index: {}]
  %s1 = inlined_call_operand.vmem [shape: bf16[128,32], index: 1, kind: input, shape index: {}]
  %s2 = inlined_call_operand.vmem [shape: f32[128,1], index: 2, kind: input, shape index: {}]
  %s3 = inlined_call_operand.vmem [shape: bf16[64,128], index: 3, kind: input, shape index: {}]
  %s4 = inlined_call_operand.vmem [shape: f32[64,1], index: 4, kind: input, shape index: {}]
  %s5 = inlined_call_operand.vmem [shape: bf16[32,64], index: 5, kind: input, shape index: {}]
  %s6 = inlined_call_operand.vmem [shape: f32[32,1], index: 6, kind: input, shape index: {}]
  %s7 = inlined_call_operand.vmem [shape: bf16[8,32], index: 7, kind: input, shape index: {}]
  %s8 = inlined_call_operand.vmem [shape: f32[8,1], index: 8, kind: input, shape index: {}]
  %s9 = inlined_call_operand.hbm [shape: f32[1,8], index: 9, kind: output, shape index: {}]
  %s10 = sld [smem:[#allocation0]]
  $region46: #{tpu_custom_call.1} parent=0
    _
  %s12 = ssub.s32 1, %s10
  %s13 = scalar_select 0, %s12, %s10
  $region1: #{tpu_custom_call.1} parent=0
    #allocation2 [shape = 'u8[512]{0}', space=vmem, size = 0x400, scoped, tag = 'output window, operand 0, single buffered']
    #allocation3 [shape = 's32[1]{0}', space=sflag, size = 0x4, scoped, tag = 'scoped memory for tpu_custom_call.1']
    %14 = vsyncpa [#allocation3], 0
    // Predicated region
    $region2: #{tpu_custom_call.1} parent=1 // pred_check
      _
    $region3: #{tpu_custom_call.1} parent=1 // pred_check_branch
      %16 = sbr.rel (0) target = $region5
    $region4: #{tpu_custom_call.1} parent=1 // pred_region
      _
    $region5: #{tpu_custom_call.1} parent=1 // pred_fallthru
      _
    // Predicated region
    $region6: #{tpu_custom_call.1} parent=1 // pred_check
      _
    $region7: #{tpu_custom_call.1} parent=1 // pred_check_branch
      %18 = sbr.rel (0) target = $region9
    $region8: #{tpu_custom_call.1} parent=1 // pred_region
      _
    $region9: #{tpu_custom_call.1} parent=1 // pred_fallthru
      _
    // Predicated region
    $region10: #{tpu_custom_call.1} parent=1 // pred_check
      _
    $region11: #{tpu_custom_call.1} parent=1 // pred_check_branch
      %20 = sbr.rel (0) target = $region13
    $region12: #{tpu_custom_call.1} parent=1 // pred_region
      _
    $region13: #{tpu_custom_call.1} parent=1 // pred_fallthru
      _
    // Predicated region
    $region14: #{tpu_custom_call.1} parent=1 // pred_check
      _
    $region15: #{tpu_custom_call.1} parent=1 // pred_check_branch
      %22 = sbr.rel (0) target = $region17
    $region16: #{tpu_custom_call.1} parent=1 // pred_region
      _
    $region17: #{tpu_custom_call.1} parent=1 // pred_fallthru
      _
    // Predicated region
    $region18: #{tpu_custom_call.1} parent=1 // pred_check
      _
    $region19: #{tpu_custom_call.1} parent=1 // pred_check_branch
      %24 = sbr.rel (0) target = $region21
    $region20: #{tpu_custom_call.1} parent=1 // pred_region
      _
    $region21: #{tpu_custom_call.1} parent=1 // pred_fallthru
      _
    // Predicated region
    $region22: #{tpu_custom_call.1} parent=1 // pred_check
      _
    $region23: #{tpu_custom_call.1} parent=1 // pred_check_branch
      %26 = sbr.rel (0) target = $region25
    $region24: #{tpu_custom_call.1} parent=1 // pred_region
      _
    $region25: #{tpu_custom_call.1} parent=1 // pred_fallthru
      _
    // Predicated region
    $region26: #{tpu_custom_call.1} parent=1 // pred_check
      _
    $region27: #{tpu_custom_call.1} parent=1 // pred_check_branch
      %28 = sbr.rel (0) target = $region29
    $region28: #{tpu_custom_call.1} parent=1 // pred_region
      _
    $region29: #{tpu_custom_call.1} parent=1 // pred_fallthru
      _
    // Predicated region
    $region30: #{tpu_custom_call.1} parent=1 // pred_check
      _
    $region31: #{tpu_custom_call.1} parent=1 // pred_check_branch
      %30 = sbr.rel (0) target = $region33
    $region32: #{tpu_custom_call.1} parent=1 // pred_region
      _
    $region33: #{tpu_custom_call.1} parent=1 // pred_fallthru
      _
    // Predicated region
    $region34: #{tpu_custom_call.1} parent=1 // pred_check
      _
    $region35: #{tpu_custom_call.1} parent=1 // pred_check_branch
      %32 = sbr.rel (0) target = $region37
    $region36: #{tpu_custom_call.1} parent=1 // pred_region
      _
    $region37: #{tpu_custom_call.1} parent=1 // pred_fallthru
      _
    %v34 = vld [vmem:[%s0] sm:$0xf]
    %v35 = vld [vmem:[%s0 + $0x4] sm:$0xf]
    %v36 = vld [vmem:[%s0 + $0x8] sm:$0xf]
    %v37 = vld [vmem:[%s0 + $0xc] sm:$0xf]
    %v38 = vld [vmem:[%s1] sm:$0xf]
    %v39 = vld [vmem:[%s1 + $0x4] sm:$0xf]
    %v40 = vld [vmem:[%s1 + $0x8] sm:$0xf]
    %v41 = vld [vmem:[%s1 + $0xc] sm:$0xf]
    %v42 = vld [vmem:[%s1 + $0x10] sm:$0xf]
    %v43 = vld [vmem:[%s1 + $0x14] sm:$0xf]
    %v44 = vld [vmem:[%s1 + $0x18] sm:$0xf]
    %v45 = vld [vmem:[%s1 + $0x1c] sm:$0xf]
    %v46 = vld [vmem:[%s1 + $0x20] sm:$0xf]
    %v47 = vld [vmem:[%s1 + $0x24] sm:$0xf]
    %v48 = vld [vmem:[%s1 + $0x28] sm:$0xf]
    %v49 = vld [vmem:[%s1 + $0x2c] sm:$0xf]
    %v50 = vld [vmem:[%s1 + $0x30] sm:$0xf]
    %v51 = vld [vmem:[%s1 + $0x34] sm:$0xf]
    %v52 = vld [vmem:[%s1 + $0x38] sm:$0xf]
    %v53 = vld [vmem:[%s1 + $0x3c] sm:$0xf]
    %v54 = vld [vmem:[%s2] sm:$0xff]
    %v55 = vld [vmem:[%s2 + $0x8] sm:$0xff]
    %v56 = vld [vmem:[%s2 + $0x10] sm:$0xff]
    %v57 = vld [vmem:[%s2 + $0x18] sm:$0xff]
    %v58 = vld [vmem:[%s2 + $0x20] sm:$0xff]
    %v59 = vld [vmem:[%s2 + $0x28] sm:$0xff]
    %v60 = vld [vmem:[%s2 + $0x30] sm:$0xff]
    %v61 = vld [vmem:[%s2 + $0x38] sm:$0xff]
    %v62 = vld [vmem:[%s2 + $0x40] sm:$0xff]
    %v63 = vld [vmem:[%s2 + $0x48] sm:$0xff]
    %v64 = vld [vmem:[%s2 + $0x50] sm:$0xff]
    %v65 = vld [vmem:[%s2 + $0x58] sm:$0xff]
    %v66 = vld [vmem:[%s2 + $0x60] sm:$0xff]
    %v67 = vld [vmem:[%s2 + $0x68] sm:$0xff]
    %v68 = vld [vmem:[%s2 + $0x70] sm:$0xff]
    %v69 = vld [vmem:[%s2 + $0x78] sm:$0xff]
    %71 = vset.pattern.permute.xlu0 0
    %72 = vperm.xlu0 %71, %v54
    %v73 = vpop.permute.xlu0 %72
    %76 = vset.pattern.permute.xlu0 0
    %77 = vperm.xlu0 %76, %v55
    %v78 = vpop.permute.xlu0 %77
    %81 = vset.pattern.permute.xlu0 0
    %82 = vperm.xlu0 %81, %v56
    %v83 = vpop.permute.xlu0 %82
    %86 = vset.pattern.permute.xlu0 0
    %87 = vperm.xlu0 %86, %v57
    %v88 = vpop.permute.xlu0 %87
    %91 = vset.pattern.permute.xlu0 0
    %92 = vperm.xlu0 %91, %v58
    %v93 = vpop.permute.xlu0 %92
    %96 = vset.pattern.permute.xlu0 0
    %97 = vperm.xlu0 %96, %v59
    %v98 = vpop.permute.xlu0 %97
    %101 = vset.pattern.permute.xlu0 0
    %102 = vperm.xlu0 %101, %v60
    %v103 = vpop.permute.xlu0 %102
    %106 = vset.pattern.permute.xlu0 0
    %107 = vperm.xlu0 %106, %v61
    %v108 = vpop.permute.xlu0 %107
    %111 = vset.pattern.permute.xlu0 0
    %112 = vperm.xlu0 %111, %v62
    %v113 = vpop.permute.xlu0 %112
    %116 = vset.pattern.permute.xlu0 0
    %117 = vperm.xlu0 %116, %v63
    %v118 = vpop.permute.xlu0 %117
    %121 = vset.pattern.permute.xlu0 0
    %122 = vperm.xlu0 %121, %v64
    %v123 = vpop.permute.xlu0 %122
    %126 = vset.pattern.permute.xlu0 0
    %127 = vperm.xlu0 %126, %v65
    %v128 = vpop.permute.xlu0 %127
    %131 = vset.pattern.permute.xlu0 0
    %132 = vperm.xlu0 %131, %v66
    %v133 = vpop.permute.xlu0 %132
    %136 = vset.pattern.permute.xlu0 0
    %137 = vperm.xlu0 %136, %v67
    %v138 = vpop.permute.xlu0 %137
    %141 = vset.pattern.permute.xlu0 0
    %142 = vperm.xlu0 %141, %v68
    %v143 = vpop.permute.xlu0 %142
    %146 = vset.pattern.permute.xlu0 0
    %147 = vperm.xlu0 %146, %v69
    %v148 = vpop.permute.xlu0 %147
    %v166 = vunpack.c.l.b16 %v38
    %v167 = vunpack.c.l.b16 %v39
    %v168 = vunpack.c.l.b16 %v40
    %v169 = vunpack.c.l.b16 %v41
    %v170 = vunpack.c.l.b16 %v42
    %v171 = vunpack.c.l.b16 %v43
    %v172 = vunpack.c.l.b16 %v44
    %v173 = vunpack.c.l.b16 %v45
    %v174 = vunpack.c.l.b16 %v46
    %v175 = vunpack.c.l.b16 %v47
    %v176 = vunpack.c.l.b16 %v48
    %v177 = vunpack.c.l.b16 %v49
    %v178 = vunpack.c.l.b16 %v50
    %v179 = vunpack.c.l.b16 %v51
    %v180 = vunpack.c.l.b16 %v52
    %v181 = vunpack.c.l.b16 %v53
    %v182 = vpack.c.b16 %v167, %v166
    %v183 = vpack.c.b16 %v169, %v168
    %v184 = vpack.c.b16 %v171, %v170
    %v185 = vpack.c.b16 %v173, %v172
    %v186 = vpack.c.b16 %v175, %v174
    %v187 = vpack.c.b16 %v177, %v176
    %v188 = vpack.c.b16 %v179, %v178
    %v189 = vpack.c.b16 %v181, %v180
    %v194 = vunpack.c.l.b16 %v34
    %v195 = vunpack.c.l.b16 %v35
    %v196 = vunpack.c.l.b16 %v36
    %v197 = vunpack.c.l.b16 %v37
    %v198 = vpack.c.b16 %v195, %v194
    %v199 = vpack.c.b16 %v197, %v196
    %vm202 = vcmask 261120
    %v204 = vsel %vm202, %v182, 0
    %v207 = vsel %vm202, %v183, 0
    %v210 = vsel %vm202, %v184, 0
    %v213 = vsel %vm202, %v185, 0
    %v216 = vsel %vm202, %v186, 0
    %v219 = vsel %vm202, %v187, 0
    %v222 = vsel %vm202, %v188, 0
    %v225 = vsel %vm202, %v189, 0
    %227 = vmatprep.subr.bf16.mxu0 0
    %228 = vmatpush1.bf16.msra.mxu0 0
    %229 = vmatprep.subr.bf16.mxu0 0
    %230 = vmatpush1.bf16.msra.mxu0 0
    %231 = vmatprep.subr.bf16.mxu0 0
    %232 = vmatpush1.bf16.msra.mxu0 0
    %233 = vmatprep.subr.bf16.mxu0 0
    %234 = vmatpush1.bf16.msra.mxu0 0
    %235 = vmatprep.subr.bf16.mxu0 0
    %236 = vmatpush1.bf16.msra.mxu0 0
    %237 = vmatprep.subr.bf16.mxu0 0
    %238 = vmatpush1.bf16.msra.mxu0 0
    %239 = vmatprep.subr.bf16.mxu0 0
    %240 = vmatpush1.bf16.msra.mxu0 %v199
    %241 = vmatprep.subr.bf16.mxu0 0
    %242 = vmatpush1.bf16.msra.mxu0 %v198
    %243 = vmatprep.subr.bf16.mxu0 0
    %244 = vmatpush2.bf16.msra.mxu0 0
    %245 = vmatprep.subr.bf16.mxu0 0
    %246 = vmatpush2.bf16.msra.mxu0 0
    %247 = vmatprep.subr.bf16.mxu0 0
    %248 = vmatpush2.bf16.msra.mxu0 0
    %249 = vmatprep.subr.bf16.mxu0 0
    %250 = vmatpush2.bf16.msra.mxu0 0
    %251 = vmatprep.subr.bf16.mxu0 0
    %252 = vmatpush2.bf16.msra.mxu0 0
    %253 = vmatprep.subr.bf16.mxu0 0
    %254 = vmatpush2.bf16.msra.mxu0 0
    %255 = vmatprep.subr.bf16.mxu0 0
    %256 = vmatpush2.bf16.msra.mxu0 0
    %257 = vmatprep.subr.bf16.mxu0 0
    %258 = vmatpush2.bf16.msra.mxu0 0
    %259 = vmatprep.mubr.bf16.mxu0 0
    %260 = vmatmul.mubr.bf16.gmra.mxu0 %v204
    %v261 = vpop.f32.mrf.mxu0
    %v262 = vadd.f32 %v73, %v261
    %v263 = vpop.f32.mrf.mxu0
    %v264 = vpop.f32.mrf.mxu0
    %v265 = vadd.f32 %v78, %v264
    %v266 = vpop.f32.mrf.mxu0
    %267 = vmatprep.mubr.bf16.mxu0 0
    %268 = vmatmul.mubr.bf16.gmra.mxu0 %v207
    %v269 = vpop.f32.mrf.mxu0
    %v270 = vadd.f32 %v83, %v269
    %v271 = vpop.f32.mrf.mxu0
    %v272 = vpop.f32.mrf.mxu0
    %v273 = vadd.f32 %v88, %v272
    %v274 = vpop.f32.mrf.mxu0
    %275 = vmatprep.mubr.bf16.mxu0 0
    %276 = vmatmul.mubr.bf16.gmra.mxu0 %v210
    %v277 = vpop.f32.mrf.mxu0
    %v278 = vadd.f32 %v93, %v277
    %v279 = vpop.f32.mrf.mxu0
    %v280 = vpop.f32.mrf.mxu0
    %v281 = vadd.f32 %v98, %v280
    %v282 = vpop.f32.mrf.mxu0
    %283 = vmatprep.mubr.bf16.mxu0 0
    %284 = vmatmul.mubr.bf16.gmra.mxu0 %v213
    %v285 = vpop.f32.mrf.mxu0
    %v286 = vadd.f32 %v103, %v285
    %v287 = vpop.f32.mrf.mxu0
    %v288 = vpop.f32.mrf.mxu0
    %v289 = vadd.f32 %v108, %v288
    %v290 = vpop.f32.mrf.mxu0
    %291 = vmatprep.mubr.bf16.mxu0 0
    %292 = vmatmul.mubr.bf16.gmra.mxu0 %v216
    %v293 = vpop.f32.mrf.mxu0
    %v294 = vadd.f32 %v113, %v293
    %v295 = vpop.f32.mrf.mxu0
    %v296 = vpop.f32.mrf.mxu0
    %v297 = vadd.f32 %v118, %v296
    %v298 = vpop.f32.mrf.mxu0
    %299 = vmatprep.mubr.bf16.mxu0 0
    %300 = vmatmul.mubr.bf16.gmra.mxu0 %v219
    %v301 = vpop.f32.mrf.mxu0
    %v302 = vadd.f32 %v123, %v301
    %v303 = vpop.f32.mrf.mxu0
    %v304 = vpop.f32.mrf.mxu0
    %v305 = vadd.f32 %v128, %v304
    %v306 = vpop.f32.mrf.mxu0
    %307 = vmatprep.mubr.bf16.mxu0 0
    %308 = vmatmul.mubr.bf16.gmra.mxu0 %v222
    %v309 = vpop.f32.mrf.mxu0
    %v310 = vadd.f32 %v133, %v309
    %v311 = vpop.f32.mrf.mxu0
    %v312 = vpop.f32.mrf.mxu0
    %v313 = vadd.f32 %v138, %v312
    %v314 = vpop.f32.mrf.mxu0
    %315 = vmatprep.mubr.bf16.mxu0 0
    %316 = vmatmul.mubr.bf16.gmra.mxu0 %v225
    %v317 = vpop.f32.mrf.mxu0
    %v318 = vadd.f32 %v143, %v317
    %v319 = vpop.f32.mrf.mxu0
    %v320 = vpop.f32.mrf.mxu0
    %v321 = vadd.f32 %v148, %v320
    %v322 = vpop.f32.mrf.mxu0
    %323 = vdwg.mxu0
    %v324 = vmax.f32 %v262, 0.0
    %v325 = vmax.f32 %v265, 0.0
    %v326 = vmax.f32 %v270, 0.0
    %v327 = vmax.f32 %v273, 0.0
    %v328 = vmax.f32 %v278, 0.0
    %v329 = vmax.f32 %v281, 0.0
    %v330 = vmax.f32 %v286, 0.0
    %v331 = vmax.f32 %v289, 0.0
    %v332 = vmax.f32 %v294, 0.0
    %v333 = vmax.f32 %v297, 0.0
    %v334 = vmax.f32 %v302, 0.0
    %v335 = vmax.f32 %v305, 0.0
    %v336 = vmax.f32 %v310, 0.0
    %v337 = vmax.f32 %v313, 0.0
    %v338 = vmax.f32 %v318, 0.0
    %v339 = vmax.f32 %v321, 0.0
    %v340 = vpack.c.bf16 %v325, %v324
    %v341 = vpack.c.bf16 %v327, %v326
    %v342 = vpack.c.bf16 %v329, %v328
    %v343 = vpack.c.bf16 %v331, %v330
    %v344 = vpack.c.bf16 %v333, %v332
    %v345 = vpack.c.bf16 %v335, %v334
    %v346 = vpack.c.bf16 %v337, %v336
    %v347 = vpack.c.bf16 %v339, %v338
    %v348 = vld [vmem:[%s3] sm:$0xf]
    %v349 = vld [vmem:[%s3 + $0x4] sm:$0xf]
    %v350 = vld [vmem:[%s3 + $0x8] sm:$0xf]
    %v351 = vld [vmem:[%s3 + $0xc] sm:$0xf]
    %v352 = vld [vmem:[%s3 + $0x10] sm:$0xf]
    %v353 = vld [vmem:[%s3 + $0x14] sm:$0xf]
    %v354 = vld [vmem:[%s3 + $0x18] sm:$0xf]
    %v355 = vld [vmem:[%s3 + $0x1c] sm:$0xf]
    %v356 = vld [vmem:[%s4] sm:$0xff]
    %v357 = vld [vmem:[%s4 + $0x8] sm:$0xff]
    %v358 = vld [vmem:[%s4 + $0x10] sm:$0xff]
    %v359 = vld [vmem:[%s4 + $0x18] sm:$0xff]
    %v360 = vld [vmem:[%s4 + $0x20] sm:$0xff]
    %v361 = vld [vmem:[%s4 + $0x28] sm:$0xff]
    %v362 = vld [vmem:[%s4 + $0x30] sm:$0xff]
    %v363 = vld [vmem:[%s4 + $0x38] sm:$0xff]
    %365 = vset.pattern.permute.xlu0 0
    %366 = vperm.xlu0 %365, %v356
    %v367 = vpop.permute.xlu0 %366
    %370 = vset.pattern.permute.xlu0 0
    %371 = vperm.xlu0 %370, %v357
    %v372 = vpop.permute.xlu0 %371
    %375 = vset.pattern.permute.xlu0 0
    %376 = vperm.xlu0 %375, %v358
    %v377 = vpop.permute.xlu0 %376
    %380 = vset.pattern.permute.xlu0 0
    %381 = vperm.xlu0 %380, %v359
    %v382 = vpop.permute.xlu0 %381
    %385 = vset.pattern.permute.xlu0 0
    %386 = vperm.xlu0 %385, %v360
    %v387 = vpop.permute.xlu0 %386
    %390 = vset.pattern.permute.xlu0 0
    %391 = vperm.xlu0 %390, %v361
    %v392 = vpop.permute.xlu0 %391
    %395 = vset.pattern.permute.xlu0 0
    %396 = vperm.xlu0 %395, %v362
    %v397 = vpop.permute.xlu0 %396
    %400 = vset.pattern.permute.xlu0 0
    %401 = vperm.xlu0 %400, %v363
    %v402 = vpop.permute.xlu0 %401
    %v412 = vunpack.c.l.b16 %v348
    %v413 = vunpack.c.l.b16 %v349
    %v414 = vunpack.c.l.b16 %v350
    %v415 = vunpack.c.l.b16 %v351
    %v416 = vunpack.c.l.b16 %v352
    %v417 = vunpack.c.l.b16 %v353
    %v418 = vunpack.c.l.b16 %v354
    %v419 = vunpack.c.l.b16 %v355
    %v420 = vpack.c.b16 %v413, %v412
    %v421 = vpack.c.b16 %v415, %v414
    %v422 = vpack.c.b16 %v417, %v416
    %v423 = vpack.c.b16 %v419, %v418
    %428 = vmatprep.subr.bf16.mxu0 0
    %429 = vmatpush1.bf16.msra.mxu0 %v347
    %430 = vmatprep.subr.bf16.mxu0 0
    %431 = vmatpush1.bf16.msra.mxu0 %v346
    %432 = vmatprep.subr.bf16.mxu0 0
    %433 = vmatpush1.bf16.msra.mxu0 %v345
    %434 = vmatprep.subr.bf16.mxu0 0
    %435 = vmatpush1.bf16.msra.mxu0 %v344
    %436 = vmatprep.subr.bf16.mxu0 0
    %437 = vmatpush1.bf16.msra.mxu0 %v343
    %438 = vmatprep.subr.bf16.mxu0 0
    %439 = vmatpush1.bf16.msra.mxu0 %v342
    %440 = vmatprep.subr.bf16.mxu0 0
    %441 = vmatpush1.bf16.msra.mxu0 %v341
    %442 = vmatprep.subr.bf16.mxu0 0
    %443 = vmatpush1.bf16.msra.mxu0 %v340
    %444 = vmatprep.subr.bf16.mxu0 0
    %445 = vmatpush2.bf16.msra.mxu0 0
    %446 = vmatprep.subr.bf16.mxu0 0
    %447 = vmatpush2.bf16.msra.mxu0 0
    %448 = vmatprep.subr.bf16.mxu0 0
    %449 = vmatpush2.bf16.msra.mxu0 0
    %450 = vmatprep.subr.bf16.mxu0 0
    %451 = vmatpush2.bf16.msra.mxu0 0
    %452 = vmatprep.subr.bf16.mxu0 0
    %453 = vmatpush2.bf16.msra.mxu0 0
    %454 = vmatprep.subr.bf16.mxu0 0
    %455 = vmatpush2.bf16.msra.mxu0 0
    %456 = vmatprep.subr.bf16.mxu0 0
    %457 = vmatpush2.bf16.msra.mxu0 0
    %458 = vmatprep.subr.bf16.mxu0 0
    %459 = vmatpush2.bf16.msra.mxu0 0
    %460 = vmatprep.mubr.bf16.mxu0 0
    %461 = vmatmul.mubr.bf16.gmra.mxu0 %v420
    %v462 = vpop.f32.mrf.mxu0
    %v463 = vadd.f32 %v367, %v462
    %v464 = vpop.f32.mrf.mxu0
    %v465 = vpop.f32.mrf.mxu0
    %v466 = vadd.f32 %v372, %v465
    %v467 = vpop.f32.mrf.mxu0
    %468 = vmatprep.mubr.bf16.mxu0 0
    %469 = vmatmul.mubr.bf16.gmra.mxu0 %v421
    %v470 = vpop.f32.mrf.mxu0
    %v471 = vadd.f32 %v377, %v470
    %v472 = vpop.f32.mrf.mxu0
    %v473 = vpop.f32.mrf.mxu0
    %v474 = vadd.f32 %v382, %v473
    %v475 = vpop.f32.mrf.mxu0
    %476 = vmatprep.mubr.bf16.mxu0 0
    %477 = vmatmul.mubr.bf16.gmra.mxu0 %v422
    %v478 = vpop.f32.mrf.mxu0
    %v479 = vadd.f32 %v387, %v478
    %v480 = vpop.f32.mrf.mxu0
    %v481 = vpop.f32.mrf.mxu0
    %v482 = vadd.f32 %v392, %v481
    %v483 = vpop.f32.mrf.mxu0
    %484 = vmatprep.mubr.bf16.mxu0 0
    %485 = vmatmul.mubr.bf16.gmra.mxu0 %v423
    %v486 = vpop.f32.mrf.mxu0
    %v487 = vadd.f32 %v397, %v486
    %v488 = vpop.f32.mrf.mxu0
    %v489 = vpop.f32.mrf.mxu0
    %v490 = vadd.f32 %v402, %v489
    %v491 = vpop.f32.mrf.mxu0
    %492 = vdwg.mxu0
    %v493 = vmax.f32 %v463, 0.0
    %v494 = vmax.f32 %v466, 0.0
    %v495 = vmax.f32 %v471, 0.0
    %v496 = vmax.f32 %v474, 0.0
    %v497 = vmax.f32 %v479, 0.0
    %v498 = vmax.f32 %v482, 0.0
    %v499 = vmax.f32 %v487, 0.0
    %v500 = vmax.f32 %v490, 0.0
    %v501 = vpack.c.bf16 %v494, %v493
    %v502 = vpack.c.bf16 %v496, %v495
    %v503 = vpack.c.bf16 %v498, %v497
    %v504 = vpack.c.bf16 %v500, %v499
    %v505 = vld [vmem:[%s5] sm:$0xf]
    %v506 = vld [vmem:[%s5 + $0x4] sm:$0xf]
    %v507 = vld [vmem:[%s5 + $0x8] sm:$0xf]
    %v508 = vld [vmem:[%s5 + $0xc] sm:$0xf]
    %v509 = vld [vmem:[%s6] sm:$0xff]
    %v510 = vld [vmem:[%s6 + $0x8] sm:$0xff]
    %v511 = vld [vmem:[%s6 + $0x10] sm:$0xff]
    %v512 = vld [vmem:[%s6 + $0x18] sm:$0xff]
    %514 = vset.pattern.permute.xlu0 0
    %515 = vperm.xlu0 %514, %v509
    %v516 = vpop.permute.xlu0 %515
    %519 = vset.pattern.permute.xlu0 0
    %520 = vperm.xlu0 %519, %v510
    %v521 = vpop.permute.xlu0 %520
    %524 = vset.pattern.permute.xlu0 0
    %525 = vperm.xlu0 %524, %v511
    %v526 = vpop.permute.xlu0 %525
    %529 = vset.pattern.permute.xlu0 0
    %530 = vperm.xlu0 %529, %v512
    %v531 = vpop.permute.xlu0 %530
    %v537 = vunpack.c.l.b16 %v505
    %v538 = vunpack.c.l.b16 %v506
    %v539 = vunpack.c.l.b16 %v507
    %v540 = vunpack.c.l.b16 %v508
    %v541 = vpack.c.b16 %v538, %v537
    %v542 = vpack.c.b16 %v540, %v539
    %vm543 = vcmask 523264
    %v545 = vsel %vm543, %v541, 0
    %v548 = vsel %vm543, %v542, 0
    %550 = vmatprep.subr.bf16.mxu0 0
    %551 = vmatpush1.bf16.msra.mxu0 0
    %552 = vmatprep.subr.bf16.mxu0 0
    %553 = vmatpush1.bf16.msra.mxu0 0
    %554 = vmatprep.subr.bf16.mxu0 0
    %555 = vmatpush1.bf16.msra.mxu0 0
    %556 = vmatprep.subr.bf16.mxu0 0
    %557 = vmatpush1.bf16.msra.mxu0 0
    %558 = vmatprep.subr.bf16.mxu0 0
    %559 = vmatpush1.bf16.msra.mxu0 %v504
    %560 = vmatprep.subr.bf16.mxu0 0
    %561 = vmatpush1.bf16.msra.mxu0 %v503
    %562 = vmatprep.subr.bf16.mxu0 0
    %563 = vmatpush1.bf16.msra.mxu0 %v502
    %564 = vmatprep.subr.bf16.mxu0 0
    %565 = vmatpush1.bf16.msra.mxu0 %v501
    %566 = vmatprep.subr.bf16.mxu0 0
    %567 = vmatpush2.bf16.msra.mxu0 0
    %568 = vmatprep.subr.bf16.mxu0 0
    %569 = vmatpush2.bf16.msra.mxu0 0
    %570 = vmatprep.subr.bf16.mxu0 0
    %571 = vmatpush2.bf16.msra.mxu0 0
    %572 = vmatprep.subr.bf16.mxu0 0
    %573 = vmatpush2.bf16.msra.mxu0 0
    %574 = vmatprep.subr.bf16.mxu0 0
    %575 = vmatpush2.bf16.msra.mxu0 0
    %576 = vmatprep.subr.bf16.mxu0 0
    %577 = vmatpush2.bf16.msra.mxu0 0
    %578 = vmatprep.subr.bf16.mxu0 0
    %579 = vmatpush2.bf16.msra.mxu0 0
    %580 = vmatprep.subr.bf16.mxu0 0
    %581 = vmatpush2.bf16.msra.mxu0 0
    %582 = vmatprep.mubr.bf16.mxu0 0
    %583 = vmatmul.mubr.bf16.gmra.mxu0 %v545
    %v584 = vpop.f32.mrf.mxu0
    %v585 = vadd.f32 %v516, %v584
    %v586 = vpop.f32.mrf.mxu0
    %v587 = vpop.f32.mrf.mxu0
    %v588 = vadd.f32 %v521, %v587
    %v589 = vpop.f32.mrf.mxu0
    %590 = vmatprep.mubr.bf16.mxu0 0
    %591 = vmatmul.mubr.bf16.gmra.mxu0 %v548
    %v592 = vpop.f32.mrf.mxu0
    %v593 = vadd.f32 %v526, %v592
    %v594 = vpop.f32.mrf.mxu0
    %v595 = vpop.f32.mrf.mxu0
    %v596 = vadd.f32 %v531, %v595
    %v597 = vpop.f32.mrf.mxu0
    %598 = vdwg.mxu0
    %v599 = vmax.f32 %v585, 0.0
    %v600 = vmax.f32 %v588, 0.0
    %v601 = vmax.f32 %v593, 0.0
    %v602 = vmax.f32 %v596, 0.0
    %v603 = vpack.c.bf16 %v600, %v599
    %v604 = vpack.c.bf16 %v602, %v601
    %v605 = vld [vmem:[%s7] sm:$0xf]
    %v606 = vld [vmem:[%s8] sm:$0xff]
    %608 = vset.pattern.permute.xlu0 0
    %609 = vperm.xlu0 %608, %v606
    %v610 = vpop.permute.xlu0 %609
    %v613 = vsel %vm202, %v605, 0
    %615 = vmatprep.subr.bf16.mxu0 0
    %616 = vmatpush1.bf16.msra.mxu0 0
    %617 = vmatprep.subr.bf16.mxu0 0
    %618 = vmatpush1.bf16.msra.mxu0 0
    %619 = vmatprep.subr.bf16.mxu0 0
    %620 = vmatpush1.bf16.msra.mxu0 0
    %621 = vmatprep.subr.bf16.mxu0 0
    %622 = vmatpush1.bf16.msra.mxu0 0
    %623 = vmatprep.subr.bf16.mxu0 0
    %624 = vmatpush1.bf16.msra.mxu0 0
    %625 = vmatprep.subr.bf16.mxu0 0
    %626 = vmatpush1.bf16.msra.mxu0 0
    %627 = vmatprep.subr.bf16.mxu0 0
    %628 = vmatpush1.bf16.msra.mxu0 %v604
    %629 = vmatprep.subr.bf16.mxu0 0
    %630 = vmatpush1.bf16.msra.mxu0 %v603
    %631 = vmatprep.subr.bf16.mxu0 0
    %632 = vmatpush2.bf16.msra.mxu0 0
    %633 = vmatprep.subr.bf16.mxu0 0
    %634 = vmatpush2.bf16.msra.mxu0 0
    %635 = vmatprep.subr.bf16.mxu0 0
    %636 = vmatpush2.bf16.msra.mxu0 0
    %637 = vmatprep.subr.bf16.mxu0 0
    %638 = vmatpush2.bf16.msra.mxu0 0
    %639 = vmatprep.subr.bf16.mxu0 0
    %640 = vmatpush2.bf16.msra.mxu0 0
    %641 = vmatprep.subr.bf16.mxu0 0
    %642 = vmatpush2.bf16.msra.mxu0 0
    %643 = vmatprep.subr.bf16.mxu0 0
    %644 = vmatpush2.bf16.msra.mxu0 0
    %645 = vmatprep.subr.bf16.mxu0 0
    %646 = vmatpush2.bf16.msra.mxu0 0
    %647 = vmatprep.mubr.bf16.mxu0 0
    %648 = vmatmul.mubr.bf16.gmra.mxu0 %v613
    %v649 = vpop.f32.mrf.mxu0
    %v650 = vadd.f32 %v610, %v649
    %v651 = vpop.f32.mrf.mxu0
    %v652 = vpop.f32.mrf.mxu0
    %v653 = vpop.f32.mrf.mxu0
    %654 = vdwg.mxu0
    %v655 = vxor.u32 %v650, 2147483648
    %v656 = vmul.f32 %v655, 1.442695
    %v657 = vpow.pop %v656
    %v658 = vadd.f32 %v657, 1.0
    %v659 = vrcp.pop %v658
    %v660 = vmul.f32 1.0, %v659
    %vm661 = vcmask 57344
    %662 = vst.msk [vmem:[#allocation2] sm:$0x1] %vm661, %v660
    // Predicated region
    $region38: #{tpu_custom_call.1} parent=1 // pred_check
      _
    $region39: #{tpu_custom_call.1} parent=1 // pred_check_branch
      %664 = sbr.rel (0) target = $region41
    $region40: #{tpu_custom_call.1} parent=1 // pred_region
      %s666 = ssub.s32 16, 16
      %667 = vsyncadd [#allocation3], %s666
      %s669 = sshll.u32 [#allocation2], 4
      %s670 = int_to_ptr.vmem [resolvable:$true] %s669
      %672 = dma.vmem_to_hbm [thread:$0]  %s670, 16, %s9, [#allocation3]
    $region41: #{tpu_custom_call.1} parent=1 // pred_fallthru
      _
    // Predicated region
    $region42: #{tpu_custom_call.1} parent=1 // pred_check
      _
    $region43: #{tpu_custom_call.1} parent=1 // pred_check_branch
      %674 = sbr.rel (0) target = $region45
    $region44: #{tpu_custom_call.1} parent=1 // pred_region
      %675 = dma.done [#allocation3], 16
    $region45: #{tpu_custom_call.1} parent=1 // pred_fallthru
      _
    %676 = vsyncpa [#allocation3], 1

</llo_original>
